<compile_context>
chip_gen: v7x
topology: tpu7x:2x2x1
jax: 0.10.0
libtpu: 0.0.40
codegen_flags: <defaults>
</compile_context>

<pallas_src>
import functools

import jax
import jax.numpy as jnp
from jax.experimental import pallas as pl
from jax.experimental.pallas import tpu as pltpu


def _round_up(a, b):
    return -(-a // b) * b


# ---------------------------------------------------------------------------
# Fused kernel: o = resblocks(relu(x @ w1))
# ---------------------------------------------------------------------------
def _make_dimred_kernel(num_res, compute_dtype):
    """Build the fused kernel for a static number of residual blocks."""

    def kernel(*refs):
        if num_res > 0:
            x_ref, w1_ref, wa_ref, wb_ref, o_ref = refs
        else:
            x_ref, w1_ref, o_ref = refs

        # fc1 + ReLU : MXU in compute_dtype (bf16), accumulate / ReLU in f32.
        x = x_ref[...].astype(compute_dtype)
        y = jnp.dot(x, w1_ref[...], preferred_element_type=jnp.float32)
        y = jnp.maximum(y, 0.0)

        # Residual blocks, fully VMEM/vreg-resident. num_res is small and
        # static, so a static unroll is fine.
        for l in range(num_res):
            h = jnp.dot(y.astype(compute_dtype), wa_ref[l],
                        preferred_element_type=jnp.float32)
            h = jnp.maximum(h, 0.0)
            t = jnp.dot(h.astype(compute_dtype), wb_ref[l],
                        preferred_element_type=jnp.float32)
            t = jnp.maximum(t, 0.0)
            y = y + t                      # residual add in f32

        o_ref[...] = y.astype(o_ref.dtype)

    return kernel


# ---------------------------------------------------------------------------
# Parameters
# ---------------------------------------------------------------------------
def init_dim_reduction(key, n_channels, m_dim=512, num_layer_res=0,
                       dtype=jnp.float32):
    """PyTorch-shaped params: fc1.weight (m_dim, n_channels); each residual
    block has two (m_dim, m_dim) bias-free weights."""
    keys = jax.random.split(key, 1 + 2 * num_layer_res)
    bound1 = 1.0 / jnp.sqrt(n_channels)
    fc1_w = jax.random.uniform(keys[0], (m_dim, n_channels), dtype,
                               minval=-bound1, maxval=bound1)
    bound2 = 1.0 / jnp.sqrt(m_dim)
    res_ws = []
    for ii in range(num_layer_res):
        wa = jax.random.uniform(keys[1 + 2 * ii], (m_dim, m_dim), dtype,
                                minval=-bound2, maxval=bound2)
        wb = jax.random.uniform(keys[2 + 2 * ii], (m_dim, m_dim), dtype,
                                minval=-bound2, maxval=bound2)
        res_ws.append((wa, wb))
    return {"fc1_w": fc1_w, "res": res_ws}


def prepare_params(params, compute_dtype=jnp.bfloat16):
    """One-time prep: transpose to x@W layout, stack residual weights,
    cast to the MXU compute dtype. Do this ONCE, outside the hot path."""
    prepped = {"fc1_w": jnp.asarray(params["fc1_w"]).T.astype(compute_dtype)}
    if params["res"]:
        prepped["res_wa"] = jnp.stack(
            [wa.T for wa, _ in params["res"]]).astype(compute_dtype)
        prepped["res_wb"] = jnp.stack(
            [wb.T for _, wb in params["res"]]).astype(compute_dtype)
    return prepped


# ---------------------------------------------------------------------------
# Forward
# ---------------------------------------------------------------------------
@functools.partial(jax.jit, static_argnames=("row_tile", "out_dtype"))
def dim_reduction_forward(prepped, x, *, row_tile=512, out_dtype=jnp.float32):
    """x: (N, n_channels) f32  ->  (N, m_dim) out_dtype."""
    w1 = prepped["fc1_w"]                     # (Cin, C)
    wa = prepped.get("res_wa", None)          # (L, C, C) or None
    wb = prepped.get("res_wb", None)
    num_res = 0 if wa is None else wa.shape[0]

    n, cin = x.shape
    c = w1.shape[1]
    compute_dtype = w1.dtype

    # --- row tiling: multiple of 8, capped by row_tile, and small enough that
    #     the grid has >= 2 steps when N allows (v7x megacore sharding of the
    #     "parallel" row axis). No padding: the last tile is ragged and Pallas
    #     masks its out-of-bounds output rows.
    tm = _round_up(max(8, int(row_tile)), 8)
    half = _round_up(pl.cdiv(n, 2), 8)
    tm = max(8, min(tm, half))
    grid = (pl.cdiv(n, tm),)

    kernel = _make_dimred_kernel(num_res, compute_dtype)

    # Whole-array VMEM residency for weights: single-buffered, DMA'd once.
    resident = pl.BlockSpec(memory_space=pltpu.MemorySpace.VMEM)
    in_specs = [
        pl.BlockSpec((tm, cin), lambda i: (i, 0)),   # x: row tiles, pipelined
        resident,                                    # fc1 weight
    ]
    operands = [x, w1]
    if num_res > 0:
        in_specs += [resident, resident]             # wa / wb stacks
        operands += [wa, wb]
    out_spec = pl.BlockSpec((tm, c), lambda i: (i, 0))

    # --- VMEM budget: single-buffered weights + double-buffered activation
    #     tiles + in-kernel f32 slabs; cap at 75% of physical VMEM so the same
    #     code adapts to v5e/v6e (128 MiB) vs v7x (64 MiB).
    wsz = jnp.dtype(compute_dtype).itemsize
    w_bytes = (cin * c + 2 * num_res * c * c) * wsz
    act_bytes = (2 * tm * cin * x.dtype.itemsize
                 + 2 * tm * c * jnp.dtype(out_dtype).itemsize)
    slab_bytes = 3 * tm * c * 4
    need = w_bytes + act_bytes + slab_bytes
    try:
        phys = int(pltpu.get_tpu_info().vmem_capacity_bytes)
    except Exception:
        phys = 64 * 1024 * 1024          # conservative v7x assumption
    vmem_limit = int(min(max(int(1.5 * need), 32 * 1024 * 1024),
                         int(0.75 * phys)))

    flops = 2 * n * cin * c + num_res * 2 * (2 * n * c * c)
    bytes_accessed = (n * cin * x.dtype.itemsize + w_bytes
                      + n * c * jnp.dtype(out_dtype).itemsize)

    return pl.pallas_call(
        kernel,
        out_shape=jax.ShapeDtypeStruct((n, c), out_dtype),
        grid_spec=pltpu.PrefetchScalarGridSpec(
            num_scalar_prefetch=0,
            grid=grid,
            in_specs=in_specs,
            out_specs=out_spec,
        ),
        compiler_params=pltpu.CompilerParams(
            dimension_semantics=("parallel",),
            vmem_limit_bytes=vmem_limit,
        ),
        cost_estimate=pl.CostEstimate(
            flops=flops, transcendentals=0, bytes_accessed=bytes_accessed),
    )(*operands)


# ---------------------------------------------------------------------------
# Pure-JAX reference (mimics the same bf16-MXU / f32-accumulate semantics)
# ---------------------------------------------------------------------------
def dim_reduction_ref(params, x, compute_dtype=jnp.float32):
    cd = compute_dtype
    y = jnp.dot(x.astype(cd), params["fc1_w"].T.astype(cd),
                preferred_element_type=jnp.float32)
    y = jnp.maximum(y, 0.0)
    for wa, wb in params["res"]:
        h = jnp.maximum(jnp.dot(y.astype(cd), wa.T.astype(cd),
                                preferred_element_type=jnp.float32), 0.0)
        t = jnp.maximum(jnp.dot(h.astype(cd), wb.T.astype(cd),
                                preferred_element_type=jnp.float32), 0.0)
        y = y + t
    return y


# ---------------------------------------------------------------------------
if __name__ == "__main__":
    key = jax.random.PRNGKey(0)
    k_x, k_p = jax.random.split(key)

    N = 200              # number of instances (not a multiple of the tile)
    n_channels = 64      # input feature dim
    m_dim = 128          # reduced dim
    num_layer_res = 2
    compute_dtype = jnp.bfloat16

    x = jax.random.normal(k_x, (N, n_channels), jnp.float32)
    params = init_dim_reduction(k_p, n_channels, m_dim, num_layer_res)
    prepped = prepare_params(params, compute_dtype)   # one-time weight prep

    # small row tile so the demo exercises a multi-tile grid + a ragged tile
    out = dim_reduction_forward(prepped, x, row_tile=64)
    out = jax.block_until_ready(out)

    ref = dim_reduction_ref(params, x, compute_dtype)
    assert out.shape == (N, m_dim)
    assert jnp.allclose(out, ref, atol=2e-2, rtol=2e-2), "mismatch vs reference"

    # also exercise the numLayer_Res == 0 path (fc1 + ReLU only), default tile
    params0 = init_dim_reduction(k_p, n_channels, m_dim, 0)
    prep0 = prepare_params(params0, compute_dtype)
    out0 = jax.block_until_ready(dim_reduction_forward(prep0, x))
    ref0 = dim_reduction_ref(params0, x, compute_dtype)
    assert out0.shape == (N, m_dim)
    assert jnp.allclose(out0, ref0, atol=2e-2, rtol=2e-2), "mismatch (L=0)"

    print("KERNEL_OK")
</pallas_src>

<mosaic_0001>
module attributes {stable_mosaic.version = 11 : i64} {
  func.func @kernel(%arg0: i32, %arg1: memref<64x64xf32, #tpu.memory_space<vmem>>, %arg2: memref<64x128xbf16, #tpu.memory_space<vmem>>, %arg3: memref<2x128x128xbf16, #tpu.memory_space<vmem>>, %arg4: memref<2x128x128xbf16, #tpu.memory_space<vmem>>, %arg5: memref<64x128xf32, #tpu.memory_space<vmem>>) attributes {dimension_semantics = [#tpu.dimension_semantics<parallel>], iteration_bounds = array<i64: 4>, scalar_prefetch = 0 : i64, scratch_operands = 0 : i64, tpu.core_type = #tpu.core_type<tc>, window_params = [{transform_indices = @transform_0, window_bounds = array<i64: 64, 64>}, {pipeline_mode = #tpu.pipeline_mode<synchronous>, transform_indices = @transform_1, window_bounds = array<i64: 64, 128>}, {pipeline_mode = #tpu.pipeline_mode<synchronous>, transform_indices = @transform_2, window_bounds = array<i64: 2, 128, 128>}, {pipeline_mode = #tpu.pipeline_mode<synchronous>, transform_indices = @transform_3, window_bounds = array<i64: 2, 128, 128>}, {transform_indices = @transform_4, window_bounds = array<i64: 64, 128>}]} {
    %c0 = arith.constant 0 : index
    %c0_0 = arith.constant 0 : index
    %0 = vector.load %arg1[%c0, %c0_0] : memref<64x64xf32, #tpu.memory_space<vmem>>, vector<64x64xf32>
    %1 = arith.truncf %0 : vector<64x64xf32> to vector<64x64xbf16>
    %c0_1 = arith.constant 0 : index
    %c0_2 = arith.constant 0 : index
    %2 = vector.load %arg2[%c0_1, %c0_2] : memref<64x128xbf16, #tpu.memory_space<vmem>>, vector<64x128xbf16>
    %cst = arith.constant dense<0.000000e+00> : vector<64x128xf32>
    %3 = tpu.matmul %1, %2, %cst {dimension_numbers = #tpu.dot_dimension_numbers<[1], [0], [0], [1], [0, 0, 1, 1], [], []>} : vector<64x64xbf16>, vector<64x128xbf16>, vector<64x128xf32> -> vector<64x128xf32>
    %cst_3 = arith.constant 0.000000e+00 : f32
    %4 = vector.broadcast %cst_3 : f32 to vector<64x128xf32>
    %5 = arith.maximumf %3, %4 : vector<64x128xf32>
    %6 = arith.truncf %5 : vector<64x128xf32> to vector<64x128xbf16>
    %c0_4 = arith.constant 0 : index
    %c0_5 = arith.constant 0 : index
    %c0_6 = arith.constant 0 : index
    %7 = vector.load %arg3[%c0_4, %c0_5, %c0_6] : memref<2x128x128xbf16, #tpu.memory_space<vmem>>, vector<1x128x128xbf16>
    %8 = vector.shape_cast %7 : vector<1x128x128xbf16> to vector<128x128xbf16>
    %cst_7 = arith.constant dense<0.000000e+00> : vector<64x128xf32>
    %9 = tpu.matmul %6, %8, %cst_7 {dimension_numbers = #tpu.dot_dimension_numbers<[1], [0], [0], [1], [0, 0, 1, 1], [], []>} : vector<64x128xbf16>, vector<128x128xbf16>, vector<64x128xf32> -> vector<64x128xf32>
    %cst_8 = arith.constant 0.000000e+00 : f32
    %10 = vector.broadcast %cst_8 : f32 to vector<64x128xf32>
    %11 = arith.maximumf %9, %10 : vector<64x128xf32>
    %12 = arith.truncf %11 : vector<64x128xf32> to vector<64x128xbf16>
    %c0_9 = arith.constant 0 : index
    %c0_10 = arith.constant 0 : index
    %c0_11 = arith.constant 0 : index
    %13 = vector.load %arg4[%c0_9, %c0_10, %c0_11] : memref<2x128x128xbf16, #tpu.memory_space<vmem>>, vector<1x128x128xbf16>
    %14 = vector.shape_cast %13 : vector<1x128x128xbf16> to vector<128x128xbf16>
    %cst_12 = arith.constant dense<0.000000e+00> : vector<64x128xf32>
    %15 = tpu.matmul %12, %14, %cst_12 {dimension_numbers = #tpu.dot_dimension_numbers<[1], [0], [0], [1], [0, 0, 1, 1], [], []>} : vector<64x128xbf16>, vector<128x128xbf16>, vector<64x128xf32> -> vector<64x128xf32>
    %cst_13 = arith.constant 0.000000e+00 : f32
    %16 = vector.broadcast %cst_13 : f32 to vector<64x128xf32>
    %17 = arith.maximumf %15, %16 : vector<64x128xf32>
    %18 = arith.addf %5, %17 : vector<64x128xf32>
    %19 = arith.truncf %18 : vector<64x128xf32> to vector<64x128xbf16>
    %c1 = arith.constant 1 : index
    %c0_14 = arith.constant 0 : index
    %c0_15 = arith.constant 0 : index
    %20 = vector.load %arg3[%c1, %c0_14, %c0_15] : memref<2x128x128xbf16, #tpu.memory_space<vmem>>, vector<1x128x128xbf16>
    %21 = vector.shape_cast %20 : vector<1x128x128xbf16> to vector<128x128xbf16>
    %cst_16 = arith.constant dense<0.000000e+00> : vector<64x128xf32>
    %22 = tpu.matmul %19, %21, %cst_16 {dimension_numbers = #tpu.dot_dimension_numbers<[1], [0], [0], [1], [0, 0, 1, 1], [], []>} : vector<64x128xbf16>, vector<128x128xbf16>, vector<64x128xf32> -> vector<64x128xf32>
    %cst_17 = arith.constant 0.000000e+00 : f32
    %23 = vector.broadcast %cst_17 : f32 to vector<64x128xf32>
    %24 = arith.maximumf %22, %23 : vector<64x128xf32>
    %25 = arith.truncf %24 : vector<64x128xf32> to vector<64x128xbf16>
    %c1_18 = arith.constant 1 : index
    %c0_19 = arith.constant 0 : index
    %c0_20 = arith.constant 0 : index
    %26 = vector.load %arg4[%c1_18, %c0_19, %c0_20] : memref<2x128x128xbf16, #tpu.memory_space<vmem>>, vector<1x128x128xbf16>
    %27 = vector.shape_cast %26 : vector<1x128x128xbf16> to vector<128x128xbf16>
    %cst_21 = arith.constant dense<0.000000e+00> : vector<64x128xf32>
    %28 = tpu.matmul %25, %27, %cst_21 {dimension_numbers = #tpu.dot_dimension_numbers<[1], [0], [0], [1], [0, 0, 1, 1], [], []>} : vector<64x128xbf16>, vector<128x128xbf16>, vector<64x128xf32> -> vector<64x128xf32>
    %cst_22 = arith.constant 0.000000e+00 : f32
    %29 = vector.broadcast %cst_22 : f32 to vector<64x128xf32>
    %30 = arith.maximumf %28, %29 : vector<64x128xf32>
    %31 = arith.addf %18, %30 : vector<64x128xf32>
    %c0_23 = arith.constant 0 : index
    %c0_24 = arith.constant 0 : index
    %32 = vector.load %arg5[%c0_23, %c0_24] : memref<64x128xf32, #tpu.memory_space<vmem>>, vector<64x128xf32>
    tpu.vector_store %arg5[%c0_23, %c0_24], %31 {strides = array<i32>} : memref<64x128xf32, #tpu.memory_space<vmem>>, vector<64x128xf32>,
    return
  }
  func.func @transform_0(%arg0: i32) -> (i32, i32) {
    %c0_i32 = arith.constant 0 : i32
    %c0_i32_0 = arith.constant 0 : i32
    return %arg0, %c0_i32 : i32, i32
  }
  func.func @transform_1(%arg0: i32) -> (i32, i32) {
    %c0_i32 = arith.constant 0 : i32
    %c0_i32_0 = arith.constant 0 : i32
    %c0_i32_1 = arith.constant 0 : i32
    return %c0_i32, %c0_i32_0 : i32, i32
  }
  func.func @transform_2(%arg0: i32) -> (i32, i32, i32) {
    %c0_i32 = arith.constant 0 : i32
    %c0_i32_0 = arith.constant 0 : i32
    %c0_i32_1 = arith.constant 0 : i32
    %c0_i32_2 = arith.constant 0 : i32
    return %c0_i32, %c0_i32_0, %c0_i32_1 : i32, i32, i32
  }
  func.func @transform_3(%arg0: i32) -> (i32, i32, i32) {
    %c0_i32 = arith.constant 0 : i32
    %c0_i32_0 = arith.constant 0 : i32
    %c0_i32_1 = arith.constant 0 : i32
    %c0_i32_2 = arith.constant 0 : i32
    return %c0_i32, %c0_i32_0, %c0_i32_1 : i32, i32, i32
  }
  func.func @transform_4(%arg0: i32) -> (i32, i32) {
    %c0_i32 = arith.constant 0 : i32
    %c0_i32_0 = arith.constant 0 : i32
    return %arg0, %c0_i32 : i32, i32
  }
}

</mosaic_0001>

<llo_original>
// kernel: dim_reduction_forward.1
$region0: #{dim_reduction_forward.1}
  #allocation0 [shape = 'u32[]', space=smem, size = 0x4, offset = 0x4, fixed_abs, tag = 'smem constant byte address 0x4 - core index']
  #allocation1 [shape = 'u32[144,128]{1,0:T(1,128)}', space=vmem, size = 0x12000, scoped, tag = 'internal scratch']
  %s0 = inlined_call_operand.vmem [shape: f32[200,64], index: 0, kind: input, shape index: {}]
  %s1 = inlined_call_operand.vmem [shape: bf16[64,128], index: 1, kind: input, shape index: {}]
  %s2 = inlined_call_operand.vmem [shape: bf16[2,128,128], index: 2, kind: input, shape index: {}]
  %s3 = inlined_call_operand.vmem [shape: bf16[2,128,128], index: 3, kind: input, shape index: {}]
  %s4 = inlined_call_operand.hbm [shape: f32[200,128], index: 4, kind: output, shape index: {}]
  %s5 = sld [smem:[#allocation0]]
  $region49: #{dim_reduction_forward.1} parent=0
    _
  %s7 = ssub.s32 1, %s5
  %s8 = scalar_select 0, %s7, %s5
  $region1: #{dim_reduction_forward.1} parent=0
    #allocation2 [shape = 'u8[65536]{0}', space=vmem, size = 0x10000, scoped, tag = 'output window, operand 0']
    #allocation3 [shape = 's32[2]{0}', space=sflag, size = 0x8, scoped, tag = 'scoped memory for dim_reduction_forward.1']
    %9 = vsyncpa [#allocation3], 0
    %s10 = scalar_lea.sflag [#allocation3], 1
    %11 = vsyncpa %s10, 0
    loop: start=0, step=1, limit=6
    $region2: #{dim_reduction_forward.1} parent=1 // loop_pre_header
      _
    $region3: #{dim_reduction_forward.1} parent=1 // loop_header
      %s13 = sphi 0, %s17
      %p14 = scmp.ge.s32.totalorder %s13, 6
      %s23 = sphi 0, %s25
      %s26 = sphi 0, %s23
      %s27 = sphi 0, %s26
      %s43 = sphi 0, %s27
      %s47 = sphi 0, %s47
      %s49 = sphi 0, %s47
      %s50 = sphi 0, %s49
      %s64 = sphi 0, %s50
      %s68 = sphi 0, %s68
      %s70 = sphi 0, %s68
      %s71 = sphi 0, %s70
      %s85 = sphi 0, %s71
      %s89 = sphi 0, %s89
      %s91 = sphi 0, %s89
      %s92 = sphi 0, %s91
      %s106 = sphi 0, %s92
      %s112 = sphi 0, %s114
      %s115 = sphi 0, %s112
      %s116 = sphi 0, %s115
      %s132 = sphi 0, %s116
    $region4: #{dim_reduction_forward.1} parent=1 // loop_header_branch
      %16 = sbr.rel (%p14) target = $region8
    $region5: #{dim_reduction_forward.1} parent=1 // loop_body
      %s18 = ssub.s32 %s13, 1
      %s19 = ssub.s32 %s13, 2
      %s20 = sadd.s32 %s13, 1
      %s21 = ssub.s32 %s13, %s20
      %p22 = scmp.eq.s32.totalorder %s21, 0
      %s24 = sadd.s32 %s23, 1
      %s25 = scalar_select %p22, %s23, %s24
      %p28 = pneg %p22
      %p29 = scmp.eq.s32.totalorder %s13, 3
      %p30 = por %p28, %p29
      %p31 = scmp.ne.s32.totalorder %s23, %s26
      %p32 = scmp.eq.s32.totalorder %s13, 0
      %p33 = por %p31, %p32
      %p34 = scmp.ne.s32.totalorder %s23, %s26
      %p35 = scmp.eq.s32.totalorder %s18, 3
      %p36 = por %p34, %p35
      %p37 = scmp.ne.s32.totalorder %s26, %s27
      %p38 = scmp.eq.s32.totalorder %s18, 0
      %p39 = por %p37, %p38
      %p40 = scmp.ne.s32.totalorder %s26, %s27
      %p41 = scmp.eq.s32.totalorder %s19, 3
      %p42 = por %p40, %p41
      %p44 = scmp.ne.s32.totalorder %s27, %s43
      %p45 = scmp.eq.s32.totalorder %s19, 0
      %p46 = por %p44, %p45
      %s48 = sadd.s32 %s47, 1
      %p51 = scmp.eq.s32.totalorder %s13, 3
      %p52 = scmp.ne.s32.totalorder %s47, %s49
      %p53 = scmp.eq.s32.totalorder %s13, 0
      %p54 = por %p52, %p53
      %p55 = scmp.ne.s32.totalorder %s47, %s49
      %p56 = scmp.eq.s32.totalorder %s18, 3
      %p57 = por %p55, %p56
      %p58 = scmp.ne.s32.totalorder %s49, %s50
      %p59 = scmp.eq.s32.totalorder %s18, 0
      %p60 = por %p58, %p59
      %p61 = scmp.ne.s32.totalorder %s49, %s50
      %p62 = scmp.eq.s32.totalorder %s19, 3
      %p63 = por %p61, %p62
      %p65 = scmp.ne.s32.totalorder %s50, %s64
      %p66 = scmp.eq.s32.totalorder %s19, 0
      %p67 = por %p65, %p66
      %s69 = sadd.s32 %s68, 1
      %p72 = scmp.eq.s32.totalorder %s13, 3
      %p73 = scmp.ne.s32.totalorder %s68, %s70
      %p74 = scmp.eq.s32.totalorder %s13, 0
      %p75 = por %p73, %p74
      %p76 = scmp.ne.s32.totalorder %s68, %s70
      %p77 = scmp.eq.s32.totalorder %s18, 3
      %p78 = por %p76, %p77
      %p79 = scmp.ne.s32.totalorder %s70, %s71
      %p80 = scmp.eq.s32.totalorder %s18, 0
      %p81 = por %p79, %p80
      %p82 = scmp.ne.s32.totalorder %s70, %s71
      %p83 = scmp.eq.s32.totalorder %s19, 3
      %p84 = por %p82, %p83
      %p86 = scmp.ne.s32.totalorder %s71, %s85
      %p87 = scmp.eq.s32.totalorder %s19, 0
      %p88 = por %p86, %p87
      %s90 = sadd.s32 %s89, 1
      %p93 = scmp.eq.s32.totalorder %s13, 3
      %p94 = scmp.ne.s32.totalorder %s89, %s91
      %p95 = scmp.eq.s32.totalorder %s13, 0
      %p96 = por %p94, %p95
      %p97 = scmp.ne.s32.totalorder %s89, %s91
      %p98 = scmp.eq.s32.totalorder %s18, 3
      %p99 = por %p97, %p98
      %p100 = scmp.ne.s32.totalorder %s91, %s92
      %p101 = scmp.eq.s32.totalorder %s18, 0
      %p102 = por %p100, %p101
      %p103 = scmp.ne.s32.totalorder %s91, %s92
      %p104 = scmp.eq.s32.totalorder %s19, 3
      %p105 = por %p103, %p104
      %p107 = scmp.ne.s32.totalorder %s92, %s106
      %p108 = scmp.eq.s32.totalorder %s19, 0
      %p109 = por %p107, %p108
      %s110 = ssub.s32 %s13, %s20
      %p111 = scmp.eq.s32.totalorder %s110, 0
      %s113 = sadd.s32 %s112, 1
      %s114 = scalar_select %p111, %s112, %s113
      %p117 = pneg %p111
      %p118 = scmp.eq.s32.totalorder %s13, 3
      %p119 = por %p117, %p118
      %p120 = scmp.ne.s32.totalorder %s112, %s115
      %p121 = scmp.eq.s32.totalorder %s13, 0
      %p122 = por %p120, %p121
      %p123 = scmp.ne.s32.totalorder %s112, %s115
      %p124 = scmp.eq.s32.totalorder %s18, 3
      %p125 = por %p123, %p124
      %p126 = scmp.ne.s32.totalorder %s115, %s116
      %p127 = scmp.eq.s32.totalorder %s18, 0
      %p128 = por %p126, %p127
      %p129 = scmp.ne.s32.totalorder %s115, %s116
      %p130 = scmp.eq.s32.totalorder %s19, 3
      %p131 = por %p129, %p130
      %p133 = scmp.ne.s32.totalorder %s116, %s132
      %p134 = scmp.eq.s32.totalorder %s19, 0
      %p135 = por %p133, %p134
      %p136 = scmp.le.s32.totalorder 1, %s13
      %p137 = scmp.lt.s32.totalorder %s13, 5
      %p138 = pnand %p136, %p137
      %p139 = pneg %p138
      // Predicated region
      $region9: #{dim_reduction_forward.1} parent=5 // pred_check
        _
      $region10: #{dim_reduction_forward.1} parent=5 // pred_check_branch
        %141 = sbr.rel (%p138) target = $region12
      $region11: #{dim_reduction_forward.1} parent=5 // pred_region
        %s142 = ssub.s32 %s13, 1
        // Predicated region
        $region13: #{dim_reduction_forward.1} parent=11 // pred_check
          %p143 = pneg %p60
        $region14: #{dim_reduction_forward.1} parent=11 // pred_check_branch
          %145 = sbr.rel (%p143) target = $region16
        $region15: #{dim_reduction_forward.1} parent=11 // pred_region
          _
        $region16: #{dim_reduction_forward.1} parent=11 // pred_fallthru
          _
        // Predicated region
        $region17: #{dim_reduction_forward.1} parent=11 // pred_check
          %p146 = pneg %p81
        $region18: #{dim_reduction_forward.1} parent=11 // pred_check_branch
          %148 = sbr.rel (%p146) target = $region20
        $region19: #{dim_reduction_forward.1} parent=11 // pred_region
          _
        $region20: #{dim_reduction_forward.1} parent=11 // pred_fallthru
          _
        // Predicated region
        $region21: #{dim_reduction_forward.1} parent=11 // pred_check
          %p149 = pneg %p102
        $region22: #{dim_reduction_forward.1} parent=11 // pred_check_branch
          %151 = sbr.rel (%p149) target = $region24
        $region23: #{dim_reduction_forward.1} parent=11 // pred_region
          _
        $region24: #{dim_reduction_forward.1} parent=11 // pred_fallthru
          _
      $region12: #{dim_reduction_forward.1} parent=5 // pred_fallthru
        _
      %p152 = scmp.lt.s32.totalorder %s13, 4
      // Predicated region
      $region25: #{dim_reduction_forward.1} parent=5 // pred_check
        %p153 = pneg %p152
      $region26: #{dim_reduction_forward.1} parent=5 // pred_check_branch
        %155 = sbr.rel (%p153) target = $region28
      $region27: #{dim_reduction_forward.1} parent=5 // pred_region
        // Predicated region
        $region29: #{dim_reduction_forward.1} parent=27 // pred_check
          %p156 = pneg %p33
        $region30: #{dim_reduction_forward.1} parent=27 // pred_check_branch
          %158 = sbr.rel (%p156) target = $region32
        $region31: #{dim_reduction_forward.1} parent=27 // pred_region
          %s159 = smul.u32 8, %s13
          %s160 = ssub.s32 25, %s159
          %p161 = scmp.lt.s32.totalorder %s160, 8
          %s162 = scalar_select %p161, %s160, 8
          %s163 = smul.u32 128, %s162
          %p164 = scmp.lt.s32.totalorder %s159, 24
          %s165 = scalar_select %p164, %s159, 24
          %s166 = smul.addr %s165, 8
          %s167 = scalar_lea.vmem %s0, %s166
          %s168 = smul.u32 8, %s13
          %s169 = ssub.s32 25, %s168
          %p170 = scmp.lt.s32.totalorder %s169, 8
          %s171 = scalar_select %p170, %s169, 8
          %s172 = smul.u32 128, %s171
        $region32: #{dim_reduction_forward.1} parent=27 // pred_fallthru
          _
      $region28: #{dim_reduction_forward.1} parent=5 // pred_fallthru
        _
      %p173 = scmp.le.s32.totalorder 1, %s13
      %p174 = scmp.lt.s32.totalorder %s13, 5
      %p175 = pnand %p173, %p174
      %p176 = pneg %p175
      // Predicated region
      $region33: #{dim_reduction_forward.1} parent=5 // pred_check
        _
      $region34: #{dim_reduction_forward.1} parent=5 // pred_check_branch
        %178 = sbr.rel (%p175) target = $region36
      $region35: #{dim_reduction_forward.1} parent=5 // pred_region
        %s179 = ssub.s32 %s13, 1
        %s180 = smul.u32 8, %s18
        %s181 = ssub.s32 25, %s180
        %p182 = scmp.lt.s32.totalorder %s181, 8
        %s183 = scalar_select %p182, %s181, 8
        %s184 = smul.u32 128, %s183
        %p185 = scmp.lt.s32.totalorder %s180, 24
        %s186 = scalar_select %p185, %s180, 24
        %s187 = smul.addr %s186, 8
        %s188 = scalar_lea.vmem %s0, %s187
        %p189 = pneg %p39
        %p190 = pneg %p36
        %p191 = pneg %p60
        %p192 = pneg %p57
        %p193 = pneg %p81
        %p194 = pneg %p78
        %p195 = pneg %p102
        %p196 = pneg %p99
        %p197 = pneg %p128
        %p198 = pneg %p125
        %s199 = sand.u32 %s115, 1
        %s200 = scalar_lea.sflag [#allocation3], %s199
        %s201 = sand.u32 %s115, 1
        %s202 = smul.addr %s201, 64
        %s203 = scalar_lea.vmem [#allocation2], %s202
        %s204 = smul.u32 8, %s18
        %s205 = ssub.s32 25, %s204
        %p206 = scmp.lt.s32.totalorder %s205, 8
        %s207 = scalar_select %p206, %s205, 8
        %s208 = smul.u32 128, %s207
        %p209 = scmp.lt.s32.totalorder %s204, 24
        %s210 = scalar_select %p209, %s204, 24
        %s211 = smul.addr %s210, 8
        %s212 = scalar_lea.vmem %s0, %s211
        %s213 = smul.u32 8, %s18
        %s214 = ssub.s32 25, %s213
        %p215 = scmp.lt.s32.totalorder %s214, 8
        %s216 = scalar_select %p215, %s214, 8
        %s217 = smul.u32 128, %s216
        %s218 = smul.u32 8, %s18
        %s219 = ssub.s32 25, %s218
        %p220 = scmp.lt.s32.totalorder %s219, 8
        %s221 = scalar_select %p220, %s219, 8
        %s222 = smul.u32 128, %s221
        %v224 = vld [vmem:[%s212] sm:$0xff]
        %v225 = vld [vmem:[%s212 + $0x8] sm:$0xff]
        %v226 = vld [vmem:[%s212 + $0x10] sm:$0xff]
        %v227 = vld [vmem:[%s212 + $0x18] sm:$0xff]
        %v228 = vld [vmem:[%s212 + $0x20] sm:$0xff]
        %v229 = vld [vmem:[%s212 + $0x28] sm:$0xff]
        %v230 = vld [vmem:[%s212 + $0x30] sm:$0xff]
        %v231 = vld [vmem:[%s212 + $0x38] sm:$0xff]
        %v232 = vpack.c.bf16 %v225, %v224
        %v233 = vpack.c.bf16 %v227, %v226
        %v234 = vpack.c.bf16 %v229, %v228
        %v235 = vpack.c.bf16 %v231, %v230
        %v236 = vld [vmem:[%s1] sm:$0xf]
        %v237 = vld [vmem:[%s1 + $0x4] sm:$0xf]
        %v238 = vld [vmem:[%s1 + $0x8] sm:$0xf]
        %v239 = vld [vmem:[%s1 + $0xc] sm:$0xf]
        %v240 = vld [vmem:[%s1 + $0x10] sm:$0xf]
        %v241 = vld [vmem:[%s1 + $0x14] sm:$0xf]
        %v242 = vld [vmem:[%s1 + $0x18] sm:$0xf]
        %v243 = vld [vmem:[%s1 + $0x1c] sm:$0xf]
        %v252 = vunpack.c.l.b16 %v236
        %v253 = vunpack.c.l.b16 %v237
        %v254 = vunpack.c.l.b16 %v238
        %v255 = vunpack.c.l.b16 %v239
        %v256 = vunpack.c.l.b16 %v240
        %v257 = vunpack.c.l.b16 %v241
        %v258 = vunpack.c.l.b16 %v242
        %v259 = vunpack.c.l.b16 %v243
        %v260 = vpack.c.b16 %v253, %v252
        %v261 = vpack.c.b16 %v255, %v254
        %v262 = vpack.c.b16 %v257, %v256
        %v263 = vpack.c.b16 %v259, %v258
        %vm268 = vcmask 523264
        %v270 = vsel %vm268, %v232, 0
        %v273 = vsel %vm268, %v233, 0
        %v276 = vsel %vm268, %v234, 0
        %v279 = vsel %vm268, %v235, 0
        %281 = vmatprep.subr.bf16.mxu0 0
        %282 = vmatpush1.bf16.msra.mxu0 %v260
        %283 = vmatprep.subr.bf16.mxu0 0
        %284 = vmatpush1.bf16.msra.mxu0 %v261
        %285 = vmatprep.subr.bf16.mxu0 0
        %286 = vmatpush1.bf16.msra.mxu0 %v262
        %287 = vmatprep.subr.bf16.mxu0 0
        %288 = vmatpush1.bf16.msra.mxu0 %v263
        %289 = vmatprep.subr.bf16.mxu0 0
        %290 = vmatpush1.bf16.msra.mxu0 0
        %291 = vmatprep.subr.bf16.mxu0 0
        %292 = vmatpush1.bf16.msra.mxu0 0
        %293 = vmatprep.subr.bf16.mxu0 0
        %294 = vmatpush1.bf16.msra.mxu0 0
        %295 = vmatprep.subr.bf16.mxu0 0
        %296 = vmatpush1.bf16.msra.mxu0 0
        %297 = vmatprep.subr.bf16.mxu0 0
        %298 = vmatpush1.bf16.msra.mxu0 0
        %299 = vmatprep.subr.bf16.mxu0 0
        %300 = vmatpush1.bf16.msra.mxu0 0
        %301 = vmatprep.subr.bf16.mxu0 0
        %302 = vmatpush1.bf16.msra.mxu0 0
        %303 = vmatprep.subr.bf16.mxu0 0
        %304 = vmatpush1.bf16.msra.mxu0 0
        %305 = vmatprep.subr.bf16.mxu0 0
        %306 = vmatpush1.bf16.msra.mxu0 0
        %307 = vmatprep.subr.bf16.mxu0 0
        %308 = vmatpush1.bf16.msra.mxu0 0
        %309 = vmatprep.subr.bf16.mxu0 0
        %310 = vmatpush1.bf16.msra.mxu0 0
        %311 = vmatprep.subr.bf16.mxu0 0
        %312 = vmatpush1.bf16.msra.mxu0 0
        %313 = vmatprep.mubr.bf16.mxu0 0
        %314 = vmatmul.mubr.bf16.gmra.mrb[0].mxu0 %v270
        %v315 = vpop.f32.mrb[0].mxu0
        %v316 = vadd.f32 0.0, %v315
        %v317 = vpop.f32.mrb[0].mxu0
        %v318 = vpop.f32.mrb[0].mxu0
        %v319 = vadd.f32 0.0, %v318
        %v320 = vpop.f32.mrb[0].mxu0
        %321 = vmatprep.mubr.bf16.mxu0 0
        %322 = vmatmul.mubr.bf16.gmra.mrb[0].mxu0 %v273
        %v323 = vpop.f32.mrb[0].mxu0
        %v324 = vadd.f32 0.0, %v323
        %v325 = vpop.f32.mrb[0].mxu0
        %v326 = vpop.f32.mrb[0].mxu0
        %v327 = vadd.f32 0.0, %v326
        %v328 = vpop.f32.mrb[0].mxu0
        %329 = vmatprep.mubr.bf16.mxu0 0
        %330 = vmatmul.mubr.bf16.gmra.mrb[0].mxu0 %v276
        %v331 = vpop.f32.mrb[0].mxu0
        %v332 = vadd.f32 0.0, %v331
        %v333 = vpop.f32.mrb[0].mxu0
        %v334 = vpop.f32.mrb[0].mxu0
        %v335 = vadd.f32 0.0, %v334
        %v336 = vpop.f32.mrb[0].mxu0
        %337 = vmatprep.mubr.bf16.mxu0 0
        %338 = vmatmul.mubr.bf16.gmra.mrb[0].mxu0 %v279
        %v339 = vpop.f32.mrb[0].mxu0
        %v340 = vadd.f32 0.0, %v339
        %v341 = vpop.f32.mrb[0].mxu0
        %v342 = vpop.f32.mrb[0].mxu0
        %v343 = vadd.f32 0.0, %v342
        %v344 = vpop.f32.mrb[0].mxu0
        %345 = vdwg.mxu0
        %v346 = vmax.f32 %v316, 0.0
        %v347 = vmax.f32 %v319, 0.0
        %v348 = vmax.f32 %v324, 0.0
        %v349 = vmax.f32 %v327, 0.0
        %v350 = vmax.f32 %v332, 0.0
        %v351 = vmax.f32 %v335, 0.0
        %v352 = vmax.f32 %v340, 0.0
        %v353 = vmax.f32 %v343, 0.0
        %v354 = vpack.c.bf16 %v347, %v346
        %v355 = vpack.c.bf16 %v349, %v348
        %v356 = vpack.c.bf16 %v351, %v350
        %v357 = vpack.c.bf16 %v353, %v352
        %v358 = vld [vmem:[%s2] sm:$0xf]
        %v359 = vld [vmem:[%s2 + $0x4] sm:$0xf]
        %v360 = vld [vmem:[%s2 + $0x8] sm:$0xf]
        %v361 = vld [vmem:[%s2 + $0xc] sm:$0xf]
        %v362 = vld [vmem:[%s2 + $0x10] sm:$0xf]
        %v363 = vld [vmem:[%s2 + $0x14] sm:$0xf]
        %v364 = vld [vmem:[%s2 + $0x18] sm:$0xf]
        %v365 = vld [vmem:[%s2 + $0x1c] sm:$0xf]
        %v366 = vld [vmem:[%s2 + $0x20] sm:$0xf]
        %v367 = vld [vmem:[%s2 + $0x24] sm:$0xf]
        %v368 = vld [vmem:[%s2 + $0x28] sm:$0xf]
        %v369 = vld [vmem:[%s2 + $0x2c] sm:$0xf]
        %v370 = vld [vmem:[%s2 + $0x30] sm:$0xf]
        %v371 = vld [vmem:[%s2 + $0x34] sm:$0xf]
        %v372 = vld [vmem:[%s2 + $0x38] sm:$0xf]
        %v373 = vld [vmem:[%s2 + $0x3c] sm:$0xf]
        %v390 = vunpack.c.l.b16 %v358
        %v391 = vunpack.c.l.b16 %v359
        %v392 = vunpack.c.l.b16 %v360
        %v393 = vunpack.c.l.b16 %v361
        %v394 = vunpack.c.l.b16 %v362
        %v395 = vunpack.c.l.b16 %v363
        %v396 = vunpack.c.l.b16 %v364
        %v397 = vunpack.c.l.b16 %v365
        %v398 = vunpack.c.l.b16 %v366
        %v399 = vunpack.c.l.b16 %v367
        %v400 = vunpack.c.l.b16 %v368
        %v401 = vunpack.c.l.b16 %v369
        %v402 = vunpack.c.l.b16 %v370
        %v403 = vunpack.c.l.b16 %v371
        %v404 = vunpack.c.l.b16 %v372
        %v405 = vunpack.c.l.b16 %v373
        %v406 = vpack.c.b16 %v391, %v390
        %v407 = vpack.c.b16 %v393, %v392
        %v408 = vpack.c.b16 %v395, %v394
        %v409 = vpack.c.b16 %v397, %v396
        %v410 = vpack.c.b16 %v399, %v398
        %v411 = vpack.c.b16 %v401, %v400
        %v412 = vpack.c.b16 %v403, %v402
        %v413 = vpack.c.b16 %v405, %v404
        %422 = vmatprep.subr.bf16.mxu0 0
        %423 = vmatpush1.bf16.msra.mxu0 %v406
        %424 = vmatprep.subr.bf16.mxu0 0
        %425 = vmatpush1.bf16.msra.mxu0 %v407
        %426 = vmatprep.subr.bf16.mxu0 0
        %427 = vmatpush1.bf16.msra.mxu0 %v408
        %428 = vmatprep.subr.bf16.mxu0 0
        %429 = vmatpush1.bf16.msra.mxu0 %v409
        %430 = vmatprep.subr.bf16.mxu0 0
        %431 = vmatpush1.bf16.msra.mxu0 %v410
        %432 = vmatprep.subr.bf16.mxu0 0
        %433 = vmatpush1.bf16.msra.mxu0 %v411
        %434 = vmatprep.subr.bf16.mxu0 0
        %435 = vmatpush1.bf16.msra.mxu0 %v412
        %436 = vmatprep.subr.bf16.mxu0 0
        %437 = vmatpush1.bf16.msra.mxu0 %v413
        %438 = vmatprep.subr.bf16.mxu0 0
        %439 = vmatpush1.bf16.msra.mxu0 0
        %440 = vmatprep.subr.bf16.mxu0 0
        %441 = vmatpush1.bf16.msra.mxu0 0
        %442 = vmatprep.subr.bf16.mxu0 0
        %443 = vmatpush1.bf16.msra.mxu0 0
        %444 = vmatprep.subr.bf16.mxu0 0
        %445 = vmatpush1.bf16.msra.mxu0 0
        %446 = vmatprep.subr.bf16.mxu0 0
        %447 = vmatpush1.bf16.msra.mxu0 0
        %448 = vmatprep.subr.bf16.mxu0 0
        %449 = vmatpush1.bf16.msra.mxu0 0
        %450 = vmatprep.subr.bf16.mxu0 0
        %451 = vmatpush1.bf16.msra.mxu0 0
        %452 = vmatprep.subr.bf16.mxu0 0
        %453 = vmatpush1.bf16.msra.mxu0 0
        %454 = vmatprep.mubr.bf16.mxu0 0
        %455 = vmatmul.mubr.bf16.gmra.mrb[0].mxu0 %v354
        %v456 = vpop.f32.mrb[0].mxu0
        %v457 = vadd.f32 0.0, %v456
        %v458 = vpop.f32.mrb[0].mxu0
        %v459 = vpop.f32.mrb[0].mxu0
        %v460 = vadd.f32 0.0, %v459
        %v461 = vpop.f32.mrb[0].mxu0
        %462 = vmatprep.mubr.bf16.mxu0 0
        %463 = vmatmul.mubr.bf16.gmra.mrb[0].mxu0 %v355
        %v464 = vpop.f32.mrb[0].mxu0
        %v465 = vadd.f32 0.0, %v464
        %v466 = vpop.f32.mrb[0].mxu0
        %v467 = vpop.f32.mrb[0].mxu0
        %v468 = vadd.f32 0.0, %v467
        %v469 = vpop.f32.mrb[0].mxu0
        %470 = vmatprep.mubr.bf16.mxu0 0
        %471 = vmatmul.mubr.bf16.gmra.mrb[0].mxu0 %v356
        %v472 = vpop.f32.mrb[0].mxu0
        %v473 = vadd.f32 0.0, %v472
        %v474 = vpop.f32.mrb[0].mxu0
        %v475 = vpop.f32.mrb[0].mxu0
        %v476 = vadd.f32 0.0, %v475
        %v477 = vpop.f32.mrb[0].mxu0
        %478 = vmatprep.mubr.bf16.mxu0 0
        %479 = vmatmul.mubr.bf16.gmra.mrb[0].mxu0 %v357
        %v480 = vpop.f32.mrb[0].mxu0
        %v481 = vadd.f32 0.0, %v480
        %v482 = vpop.f32.mrb[0].mxu0
        %v483 = vpop.f32.mrb[0].mxu0
        %v484 = vadd.f32 0.0, %v483
        %v485 = vpop.f32.mrb[0].mxu0
        %486 = vdwg.mxu0
        %v487 = vmax.f32 %v457, 0.0
        %v488 = vmax.f32 %v460, 0.0
        %v489 = vmax.f32 %v465, 0.0
        %v490 = vmax.f32 %v468, 0.0
        %v491 = vmax.f32 %v473, 0.0
        %v492 = vmax.f32 %v476, 0.0
        %v493 = vmax.f32 %v481, 0.0
        %v494 = vmax.f32 %v484, 0.0
        %v495 = vpack.c.bf16 %v488, %v487
        %v496 = vpack.c.bf16 %v490, %v489
        %v497 = vpack.c.bf16 %v492, %v491
        %v498 = vpack.c.bf16 %v494, %v493
        %v499 = vld [vmem:[%s3] sm:$0xf]
        %v500 = vld [vmem:[%s3 + $0x4] sm:$0xf]
        %v501 = vld [vmem:[%s3 + $0x8] sm:$0xf]
        %v502 = vld [vmem:[%s3 + $0xc] sm:$0xf]
        %v503 = vld [vmem:[%s3 + $0x10] sm:$0xf]
        %v504 = vld [vmem:[%s3 + $0x14] sm:$0xf]
        %v505 = vld [vmem:[%s3 + $0x18] sm:$0xf]
        %v506 = vld [vmem:[%s3 + $0x1c] sm:$0xf]
        %v507 = vld [vmem:[%s3 + $0x20] sm:$0xf]
        %v508 = vld [vmem:[%s3 + $0x24] sm:$0xf]
        %v509 = vld [vmem:[%s3 + $0x28] sm:$0xf]
        %v510 = vld [vmem:[%s3 + $0x2c] sm:$0xf]
        %v511 = vld [vmem:[%s3 + $0x30] sm:$0xf]
        %v512 = vld [vmem:[%s3 + $0x34] sm:$0xf]
        %v513 = vld [vmem:[%s3 + $0x38] sm:$0xf]
        %v514 = vld [vmem:[%s3 + $0x3c] sm:$0xf]
        %v531 = vunpack.c.l.b16 %v499
        %v532 = vunpack.c.l.b16 %v500
        %v533 = vunpack.c.l.b16 %v501
        %v534 = vunpack.c.l.b16 %v502
        %v535 = vunpack.c.l.b16 %v503
        %v536 = vunpack.c.l.b16 %v504
        %v537 = vunpack.c.l.b16 %v505
        %v538 = vunpack.c.l.b16 %v506
        %v539 = vunpack.c.l.b16 %v507
        %v540 = vunpack.c.l.b16 %v508
        %v541 = vunpack.c.l.b16 %v509
        %v542 = vunpack.c.l.b16 %v510
        %v543 = vunpack.c.l.b16 %v511
        %v544 = vunpack.c.l.b16 %v512
        %v545 = vunpack.c.l.b16 %v513
        %v546 = vunpack.c.l.b16 %v514
        %v547 = vpack.c.b16 %v532, %v531
        %v548 = vpack.c.b16 %v534, %v533
        %v549 = vpack.c.b16 %v536, %v535
        %v550 = vpack.c.b16 %v538, %v537
        %v551 = vpack.c.b16 %v540, %v539
        %v552 = vpack.c.b16 %v542, %v541
        %v553 = vpack.c.b16 %v544, %v543
        %v554 = vpack.c.b16 %v546, %v545
        %563 = vmatprep.subr.bf16.mxu0 0
        %564 = vmatpush1.bf16.msra.mxu0 %v547
        %565 = vmatprep.subr.bf16.mxu0 0
        %566 = vmatpush1.bf16.msra.mxu0 %v548
        %567 = vmatprep.subr.bf16.mxu0 0
        %568 = vmatpush1.bf16.msra.mxu0 %v549
        %569 = vmatprep.subr.bf16.mxu0 0
        %570 = vmatpush1.bf16.msra.mxu0 %v550
        %571 = vmatprep.subr.bf16.mxu0 0
        %572 = vmatpush1.bf16.msra.mxu0 %v551
        %573 = vmatprep.subr.bf16.mxu0 0
        %574 = vmatpush1.bf16.msra.mxu0 %v552
        %575 = vmatprep.subr.bf16.mxu0 0
        %576 = vmatpush1.bf16.msra.mxu0 %v553
        %577 = vmatprep.subr.bf16.mxu0 0
        %578 = vmatpush1.bf16.msra.mxu0 %v554
        %579 = vmatprep.subr.bf16.mxu0 0
        %580 = vmatpush1.bf16.msra.mxu0 0
        %581 = vmatprep.subr.bf16.mxu0 0
        %582 = vmatpush1.bf16.msra.mxu0 0
        %583 = vmatprep.subr.bf16.mxu0 0
        %584 = vmatpush1.bf16.msra.mxu0 0
        %585 = vmatprep.subr.bf16.mxu0 0
        %586 = vmatpush1.bf16.msra.mxu0 0
        %587 = vmatprep.subr.bf16.mxu0 0
        %588 = vmatpush1.bf16.msra.mxu0 0
        %589 = vmatprep.subr.bf16.mxu0 0
        %590 = vmatpush1.bf16.msra.mxu0 0
        %591 = vmatprep.subr.bf16.mxu0 0
        %592 = vmatpush1.bf16.msra.mxu0 0
        %593 = vmatprep.subr.bf16.mxu0 0
        %594 = vmatpush1.bf16.msra.mxu0 0
        %595 = vmatprep.mubr.bf16.mxu0 0
        %596 = vmatmul.mubr.bf16.gmra.mrb[0].mxu0 %v495
        %v597 = vpop.f32.mrb[0].mxu0
        %v598 = vadd.f32 0.0, %v597
        %v599 = vpop.f32.mrb[0].mxu0
        %v600 = vpop.f32.mrb[0].mxu0
        %v601 = vadd.f32 0.0, %v600
        %v602 = vpop.f32.mrb[0].mxu0
        %603 = vmatprep.mubr.bf16.mxu0 0
        %604 = vmatmul.mubr.bf16.gmra.mrb[0].mxu0 %v496
        %v605 = vpop.f32.mrb[0].mxu0
        %v606 = vadd.f32 0.0, %v605
        %v607 = vpop.f32.mrb[0].mxu0
        %v608 = vpop.f32.mrb[0].mxu0
        %v609 = vadd.f32 0.0, %v608
        %v610 = vpop.f32.mrb[0].mxu0
        %611 = vmatprep.mubr.bf16.mxu0 0
        %612 = vmatmul.mubr.bf16.gmra.mrb[0].mxu0 %v497
        %v613 = vpop.f32.mrb[0].mxu0
        %v614 = vadd.f32 0.0, %v613
        %v615 = vpop.f32.mrb[0].mxu0
        %v616 = vpop.f32.mrb[0].mxu0
        %v617 = vadd.f32 0.0, %v616
        %v618 = vpop.f32.mrb[0].mxu0
        %619 = vmatprep.mubr.bf16.mxu0 0
        %620 = vmatmul.mubr.bf16.gmra.mrb[0].mxu0 %v498
        %v621 = vpop.f32.mrb[0].mxu0
        %v622 = vadd.f32 0.0, %v621
        %v623 = vpop.f32.mrb[0].mxu0
        %v624 = vpop.f32.mrb[0].mxu0
        %v625 = vadd.f32 0.0, %v624
        %v626 = vpop.f32.mrb[0].mxu0
        %627 = vdwg.mxu0
        %v628 = vmax.f32 %v598, 0.0
        %v629 = vmax.f32 %v601, 0.0
        %v630 = vmax.f32 %v606, 0.0
        %v631 = vmax.f32 %v609, 0.0
        %v632 = vmax.f32 %v614, 0.0
        %v633 = vmax.f32 %v617, 0.0
        %v634 = vmax.f32 %v622, 0.0
        %v635 = vmax.f32 %v625, 0.0
        %v636 = vadd.f32 %v346, %v628
        %v637 = vadd.f32 %v347, %v629
        %v638 = vadd.f32 %v348, %v630
        %v639 = vadd.f32 %v349, %v631
        %v640 = vadd.f32 %v350, %v632
        %v641 = vadd.f32 %v351, %v633
        %v642 = vadd.f32 %v352, %v634
        %v643 = vadd.f32 %v353, %v635
        %v644 = vpack.c.bf16 %v637, %v636
        %v645 = vpack.c.bf16 %v639, %v638
        %v646 = vpack.c.bf16 %v641, %v640
        %v647 = vpack.c.bf16 %v643, %v642
        %s648 = scalar_lea.vmem %s2, 64
        %v649 = vld [vmem:[%s648] sm:$0xf]
        %v650 = vld [vmem:[%s648 + $0x4] sm:$0xf]
        %v651 = vld [vmem:[%s648 + $0x8] sm:$0xf]
        %v652 = vld [vmem:[%s648 + $0xc] sm:$0xf]
        %v653 = vld [vmem:[%s648 + $0x10] sm:$0xf]
        %v654 = vld [vmem:[%s648 + $0x14] sm:$0xf]
        %v655 = vld [vmem:[%s648 + $0x18] sm:$0xf]
        %v656 = vld [vmem:[%s648 + $0x1c] sm:$0xf]
        %v657 = vld [vmem:[%s648 + $0x20] sm:$0xf]
        %v658 = vld [vmem:[%s648 + $0x24] sm:$0xf]
        %v659 = vld [vmem:[%s648 + $0x28] sm:$0xf]
        %v660 = vld [vmem:[%s648 + $0x2c] sm:$0xf]
        %v661 = vld [vmem:[%s648 + $0x30] sm:$0xf]
        %v662 = vld [vmem:[%s648 + $0x34] sm:$0xf]
        %v663 = vld [vmem:[%s648 + $0x38] sm:$0xf]
        %v664 = vld [vmem:[%s648 + $0x3c] sm:$0xf]
        %v681 = vunpack.c.l.b16 %v649
        %v682 = vunpack.c.l.b16 %v650
        %v683 = vunpack.c.l.b16 %v651
        %v684 = vunpack.c.l.b16 %v652
        %v685 = vunpack.c.l.b16 %v653
        %v686 = vunpack.c.l.b16 %v654
        %v687 = vunpack.c.l.b16 %v655
        %v688 = vunpack.c.l.b16 %v656
        %v689 = vunpack.c.l.b16 %v657
        %v690 = vunpack.c.l.b16 %v658
        %v691 = vunpack.c.l.b16 %v659
        %v692 = vunpack.c.l.b16 %v660
        %v693 = vunpack.c.l.b16 %v661
        %v694 = vunpack.c.l.b16 %v662
        %v695 = vunpack.c.l.b16 %v663
        %v696 = vunpack.c.l.b16 %v664
        %v697 = vpack.c.b16 %v682, %v681
        %v698 = vpack.c.b16 %v684, %v683
        %v699 = vpack.c.b16 %v686, %v685
        %v700 = vpack.c.b16 %v688, %v687
        %v701 = vpack.c.b16 %v690, %v689
        %v702 = vpack.c.b16 %v692, %v691
        %v703 = vpack.c.b16 %v694, %v693
        %v704 = vpack.c.b16 %v696, %v695
        %713 = vmatprep.subr.bf16.mxu0 0
        %714 = vmatpush1.bf16.msra.mxu0 %v697
        %715 = vmatprep.subr.bf16.mxu0 0
        %716 = vmatpush1.bf16.msra.mxu0 %v698
        %717 = vmatprep.subr.bf16.mxu0 0
        %718 = vmatpush1.bf16.msra.mxu0 %v699
        %719 = vmatprep.subr.bf16.mxu0 0
        %720 = vmatpush1.bf16.msra.mxu0 %v700
        %721 = vmatprep.subr.bf16.mxu0 0
        %722 = vmatpush1.bf16.msra.mxu0 %v701
        %723 = vmatprep.subr.bf16.mxu0 0
        %724 = vmatpush1.bf16.msra.mxu0 %v702
        %725 = vmatprep.subr.bf16.mxu0 0
        %726 = vmatpush1.bf16.msra.mxu0 %v703
        %727 = vmatprep.subr.bf16.mxu0 0
        %728 = vmatpush1.bf16.msra.mxu0 %v704
        %729 = vmatprep.subr.bf16.mxu0 0
        %730 = vmatpush1.bf16.msra.mxu0 0
        %731 = vmatprep.subr.bf16.mxu0 0
        %732 = vmatpush1.bf16.msra.mxu0 0
        %733 = vmatprep.subr.bf16.mxu0 0
        %734 = vmatpush1.bf16.msra.mxu0 0
        %735 = vmatprep.subr.bf16.mxu0 0
        %736 = vmatpush1.bf16.msra.mxu0 0
        %737 = vmatprep.subr.bf16.mxu0 0
        %738 = vmatpush1.bf16.msra.mxu0 0
        %739 = vmatprep.subr.bf16.mxu0 0
        %740 = vmatpush1.bf16.msra.mxu0 0
        %741 = vmatprep.subr.bf16.mxu0 0
        %742 = vmatpush1.bf16.msra.mxu0 0
        %743 = vmatprep.subr.bf16.mxu0 0
        %744 = vmatpush1.bf16.msra.mxu0 0
        %745 = vmatprep.mubr.bf16.mxu0 0
        %746 = vmatmul.mubr.bf16.gmra.mrb[0].mxu0 %v644
        %v747 = vpop.f32.mrb[0].mxu0
        %v748 = vadd.f32 0.0, %v747
        %v749 = vpop.f32.mrb[0].mxu0
        %v750 = vpop.f32.mrb[0].mxu0
        %v751 = vadd.f32 0.0, %v750
        %v752 = vpop.f32.mrb[0].mxu0
        %753 = vmatprep.mubr.bf16.mxu0 0
        %754 = vmatmul.mubr.bf16.gmra.mrb[0].mxu0 %v645
        %v755 = vpop.f32.mrb[0].mxu0
        %v756 = vadd.f32 0.0, %v755
        %v757 = vpop.f32.mrb[0].mxu0
        %v758 = vpop.f32.mrb[0].mxu0
        %v759 = vadd.f32 0.0, %v758
        %v760 = vpop.f32.mrb[0].mxu0
        %761 = vmatprep.mubr.bf16.mxu0 0
        %762 = vmatmul.mubr.bf16.gmra.mrb[0].mxu0 %v646
        %v763 = vpop.f32.mrb[0].mxu0
        %v764 = vadd.f32 0.0, %v763
        %v765 = vpop.f32.mrb[0].mxu0
        %v766 = vpop.f32.mrb[0].mxu0
        %v767 = vadd.f32 0.0, %v766
        %v768 = vpop.f32.mrb[0].mxu0
        %769 = vmatprep.mubr.bf16.mxu0 0
        %770 = vmatmul.mubr.bf16.gmra.mrb[0].mxu0 %v647
        %v771 = vpop.f32.mrb[0].mxu0
        %v772 = vadd.f32 0.0, %v771
        %v773 = vpop.f32.mrb[0].mxu0
        %v774 = vpop.f32.mrb[0].mxu0
        %v775 = vadd.f32 0.0, %v774
        %v776 = vpop.f32.mrb[0].mxu0
        %777 = vdwg.mxu0
        %v778 = vmax.f32 %v748, 0.0
        %v779 = vmax.f32 %v751, 0.0
        %v780 = vmax.f32 %v756, 0.0
        %v781 = vmax.f32 %v759, 0.0
        %v782 = vmax.f32 %v764, 0.0
        %v783 = vmax.f32 %v767, 0.0
        %v784 = vmax.f32 %v772, 0.0
        %v785 = vmax.f32 %v775, 0.0
        %v786 = vpack.c.bf16 %v779, %v778
        %v787 = vpack.c.bf16 %v781, %v780
        %v788 = vpack.c.bf16 %v783, %v782
        %v789 = vpack.c.bf16 %v785, %v784
        %s790 = scalar_lea.vmem %s3, 64
        %v791 = vld [vmem:[%s790] sm:$0xf]
        %v792 = vld [vmem:[%s790 + $0x4] sm:$0xf]
        %v793 = vld [vmem:[%s790 + $0x8] sm:$0xf]
        %v794 = vld [vmem:[%s790 + $0xc] sm:$0xf]
        %v795 = vld [vmem:[%s790 + $0x10] sm:$0xf]
        %v796 = vld [vmem:[%s790 + $0x14] sm:$0xf]
        %v797 = vld [vmem:[%s790 + $0x18] sm:$0xf]
        %v798 = vld [vmem:[%s790 + $0x1c] sm:$0xf]
        %v799 = vld [vmem:[%s790 + $0x20] sm:$0xf]
        %v800 = vld [vmem:[%s790 + $0x24] sm:$0xf]
        %v801 = vld [vmem:[%s790 + $0x28] sm:$0xf]
        %v802 = vld [vmem:[%s790 + $0x2c] sm:$0xf]
        %v803 = vld [vmem:[%s790 + $0x30] sm:$0xf]
        %v804 = vld [vmem:[%s790 + $0x34] sm:$0xf]
        %v805 = vld [vmem:[%s790 + $0x38] sm:$0xf]
        %v806 = vld [vmem:[%s790 + $0x3c] sm:$0xf]
        %v823 = vunpack.c.l.b16 %v791
        %v824 = vunpack.c.l.b16 %v792
        %v825 = vunpack.c.l.b16 %v793
        %v826 = vunpack.c.l.b16 %v794
        %v827 = vunpack.c.l.b16 %v795
        %v828 = vunpack.c.l.b16 %v796
        %v829 = vunpack.c.l.b16 %v797
        %v830 = vunpack.c.l.b16 %v798
        %v831 = vunpack.c.l.b16 %v799
        %v832 = vunpack.c.l.b16 %v800
        %v833 = vunpack.c.l.b16 %v801
        %v834 = vunpack.c.l.b16 %v802
        %v835 = vunpack.c.l.b16 %v803
        %v836 = vunpack.c.l.b16 %v804
        %v837 = vunpack.c.l.b16 %v805
        %v838 = vunpack.c.l.b16 %v806
        %v839 = vpack.c.b16 %v824, %v823
        %v840 = vpack.c.b16 %v826, %v825
        %v841 = vpack.c.b16 %v828, %v827
        %v842 = vpack.c.b16 %v830, %v829
        %v843 = vpack.c.b16 %v832, %v831
        %v844 = vpack.c.b16 %v834, %v833
        %v845 = vpack.c.b16 %v836, %v835
        %v846 = vpack.c.b16 %v838, %v837
        %855 = vmatprep.subr.bf16.mxu0 0
        %856 = vmatpush1.bf16.msra.mxu0 %v839
        %857 = vmatprep.subr.bf16.mxu0 0
        %858 = vmatpush1.bf16.msra.mxu0 %v840
        %859 = vmatprep.subr.bf16.mxu0 0
        %860 = vmatpush1.bf16.msra.mxu0 %v841
        %861 = vmatprep.subr.bf16.mxu0 0
        %862 = vmatpush1.bf16.msra.mxu0 %v842
        %863 = vmatprep.subr.bf16.mxu0 0
        %864 = vmatpush1.bf16.msra.mxu0 %v843
        %865 = vmatprep.subr.bf16.mxu0 0
        %866 = vmatpush1.bf16.msra.mxu0 %v844
        %867 = vmatprep.subr.bf16.mxu0 0
        %868 = vmatpush1.bf16.msra.mxu0 %v845
        %869 = vmatprep.subr.bf16.mxu0 0
        %870 = vmatpush1.bf16.msra.mxu0 %v846
        %871 = vmatprep.subr.bf16.mxu0 0
        %872 = vmatpush1.bf16.msra.mxu0 0
        %873 = vmatprep.subr.bf16.mxu0 0
        %874 = vmatpush1.bf16.msra.mxu0 0
        %875 = vmatprep.subr.bf16.mxu0 0
        %876 = vmatpush1.bf16.msra.mxu0 0
        %877 = vmatprep.subr.bf16.mxu0 0
        %878 = vmatpush1.bf16.msra.mxu0 0
        %879 = vmatprep.subr.bf16.mxu0 0
        %880 = vmatpush1.bf16.msra.mxu0 0
        %881 = vmatprep.subr.bf16.mxu0 0
        %882 = vmatpush1.bf16.msra.mxu0 0
        %883 = vmatprep.subr.bf16.mxu0 0
        %884 = vmatpush1.bf16.msra.mxu0 0
        %885 = vmatprep.subr.bf16.mxu0 0
        %886 = vmatpush1.bf16.msra.mxu0 0
        %887 = vmatprep.mubr.bf16.mxu0 0
        %888 = vmatmul.mubr.bf16.gmra.mrb[0].mxu0 %v786
        %v889 = vpop.f32.mrb[0].mxu0
        %v890 = vadd.f32 0.0, %v889
        %v891 = vpop.f32.mrb[0].mxu0
        %v892 = vpop.f32.mrb[0].mxu0
        %v893 = vadd.f32 0.0, %v892
        %v894 = vpop.f32.mrb[0].mxu0
        %895 = vmatprep.mubr.bf16.mxu0 0
        %896 = vmatmul.mubr.bf16.gmra.mrb[0].mxu0 %v787
        %v897 = vpop.f32.mrb[0].mxu0
        %v898 = vadd.f32 0.0, %v897
        %v899 = vpop.f32.mrb[0].mxu0
        %v900 = vpop.f32.mrb[0].mxu0
        %v901 = vadd.f32 0.0, %v900
        %v902 = vpop.f32.mrb[0].mxu0
        %903 = vmatprep.mubr.bf16.mxu0 0
        %904 = vmatmul.mubr.bf16.gmra.mrb[0].mxu0 %v788
        %v905 = vpop.f32.mrb[0].mxu0
        %v906 = vadd.f32 0.0, %v905
        %v907 = vpop.f32.mrb[0].mxu0
        %v908 = vpop.f32.mrb[0].mxu0
        %v909 = vadd.f32 0.0, %v908
        %v910 = vpop.f32.mrb[0].mxu0
        %911 = vmatprep.mubr.bf16.mxu0 0
        %912 = vmatmul.mubr.bf16.gmra.mrb[0].mxu0 %v789
        %v913 = vpop.f32.mrb[0].mxu0
        %v914 = vadd.f32 0.0, %v913
        %v915 = vpop.f32.mrb[0].mxu0
        %v916 = vpop.f32.mrb[0].mxu0
        %v917 = vadd.f32 0.0, %v916
        %v918 = vpop.f32.mrb[0].mxu0
        %919 = vdwg.mxu0
        %v920 = vmax.f32 %v890, 0.0
        %v921 = vmax.f32 %v893, 0.0
        %v922 = vmax.f32 %v898, 0.0
        %v923 = vmax.f32 %v901, 0.0
        %v924 = vmax.f32 %v906, 0.0
        %v925 = vmax.f32 %v909, 0.0
        %v926 = vmax.f32 %v914, 0.0
        %v927 = vmax.f32 %v917, 0.0
        %v928 = vadd.f32 %v636, %v920
        %v929 = vadd.f32 %v637, %v921
        %v930 = vadd.f32 %v638, %v922
        %v931 = vadd.f32 %v639, %v923
        %v932 = vadd.f32 %v640, %v924
        %v933 = vadd.f32 %v641, %v925
        %v934 = vadd.f32 %v642, %v926
        %v935 = vadd.f32 %v643, %v927
        %936 = vst [vmem:[%s203] sm:$0xff] %v928
        %937 = vst [vmem:[%s203 + $0x8] sm:$0xff] %v929
        %938 = vst [vmem:[%s203 + $0x10] sm:$0xff] %v930
        %939 = vst [vmem:[%s203 + $0x18] sm:$0xff] %v931
        %940 = vst [vmem:[%s203 + $0x20] sm:$0xff] %v932
        %941 = vst [vmem:[%s203 + $0x28] sm:$0xff] %v933
        %942 = vst [vmem:[%s203 + $0x30] sm:$0xff] %v934
        %943 = vst [vmem:[%s203 + $0x38] sm:$0xff] %v935
        %s944 = sand.u32 %s115, 1
        %s945 = scalar_lea.sflag [#allocation3], %s944
        %s946 = sand.u32 %s115, 1
        %s947 = smul.addr %s946, 64
        %s948 = scalar_lea.vmem [#allocation2], %s947
        // Predicated region
        $region37: #{dim_reduction_forward.1} parent=35 // pred_check
          %p949 = pneg %p125
        $region38: #{dim_reduction_forward.1} parent=35 // pred_check_branch
          %951 = sbr.rel (%p949) target = $region40
        $region39: #{dim_reduction_forward.1} parent=35 // pred_region
          %s952 = smul.u32 8, %s18
          %s953 = ssub.s32 25, %s952
          %p954 = scmp.lt.s32.totalorder %s953, 8
          %s955 = scalar_select %p954, %s953, 8
          %s956 = smul.u32 128, %s955
          %s958 = ssub.s32 1024, %s956
          %959 = vsyncadd %s945, %s958
          %p960 = scmp.ne.s32.totalorder 0, %s956
          %s961 = smul.addr %s952, 128
          %s962 = scalar_lea.hbm %s4, %s961
          %s963 = smul.u32 8, %s955
          %s964 = sshll.u32 %s948, 4
          %s965 = int_to_ptr.vmem [resolvable:$true] %s964
          %s966 = sshll.u32 %s963, 4
          %970 = dma.vmem_to_hbm [thread:$0]  (%p960), %s965, %s966, %s962, %s945, 128, 128, 8
        $region40: #{dim_reduction_forward.1} parent=35 // pred_fallthru
          _
      $region36: #{dim_reduction_forward.1} parent=5 // pred_fallthru
        _
      %p971 = scmp.le.s32.totalorder 2, %s13
      // Predicated region
      $region41: #{dim_reduction_forward.1} parent=5 // pred_check
        %p972 = pneg %p971
      $region42: #{dim_reduction_forward.1} parent=5 // pred_check_branch
        %974 = sbr.rel (%p972) target = $region44
      $region43: #{dim_reduction_forward.1} parent=5 // pred_region
        %s975 = ssub.s32 %s13, 2
        // Predicated region
        $region45: #{dim_reduction_forward.1} parent=43 // pred_check
          %p976 = pneg %p131
        $region46: #{dim_reduction_forward.1} parent=43 // pred_check_branch
          %978 = sbr.rel (%p976) target = $region48
        $region47: #{dim_reduction_forward.1} parent=43 // pred_region
          %s979 = sand.u32 %s116, 1
          %s980 = scalar_lea.sflag [#allocation3], %s979
          %s981 = sand.u32 %s116, 1
          %s982 = smul.addr %s981, 64
          %s983 = scalar_lea.vmem [#allocation2], %s982
          %984 = dma.done %s980, 1024
        $region48: #{dim_reduction_forward.1} parent=43 // pred_fallthru
          _
      $region44: #{dim_reduction_forward.1} parent=5 // pred_fallthru
        _
    $region6: #{dim_reduction_forward.1} parent=1 // loop_footer
      %s17 = sadd.s32 1, %s13
    $region7: #{dim_reduction_forward.1} parent=1 // loop_footer_branch
      %12 = sbr.rel target = $region3
    $region8: #{dim_reduction_forward.1} parent=1 // loop_exit
      _
    %985 = vsyncpa [#allocation3], 1
    %s986 = scalar_lea.sflag [#allocation3], 1
    %987 = vsyncpa %s986, 1

</llo_original>
